<compile_context>
chip_gen: v5e
topology: v5e:2x2
jax: 0.10.0
libtpu: 0.0.40
codegen_flags: <defaults>
</compile_context>

<pallas_src>
import functools
import math

import jax
import jax.numpy as jnp
from jax.experimental import pallas as pl
from jax.experimental.pallas import tpu as pltpu


def branch_mlp_kernel(xT_ref, w0t_ref, b0t_ref, w1t_ref, b1t_ref, w2t_ref,
                      b2t_ref, oT_ref):
    """Fused 2-hidden-layer tanh MLP + linear head on one transposed batch tile.

    Everything is features-major / batch-minor so the lane axis (last dim) is
    the >=128-wide batch tile: full-width vector loads/stores and dense
    VPU/EUP tanh work.
    """
    z = xT_ref[...].astype(jnp.float32)                                 # (in_f, tm)

    # layer 0: linear + tanh
    z = jnp.dot(w0t_ref[...], z, preferred_element_type=jnp.float32) + b0t_ref[...]
    z = jnp.tanh(z)
    # layer 1: linear + tanh
    z = jnp.dot(w1t_ref[...], z, preferred_element_type=jnp.float32) + b1t_ref[...]
    z = jnp.tanh(z)
    # layer 2 (head): linear only
    z = jnp.dot(w2t_ref[...], z, preferred_element_type=jnp.float32) + b2t_ref[...]

    oT_ref[...] = z.astype(oT_ref.dtype)


def _choose_tm(B, tm):
    """Pick a lane-dense batch tile (multiple of 128) with >=2 grid steps when possible."""
    if B <= 128:
        return B                                   # single step, full batch
    tm = min(tm, B)
    tm = max(128, (tm // 128) * 128)               # lane-dense tile
    if pl.cdiv(B, tm) < 2:
        # Split so the "parallel" batch axis has work for both v7x TensorCores
        # (one extra grid step is ~0.35us -- negligible; no-op on v5e/v6e).
        half = max(128, pl.cdiv(pl.cdiv(B, 2), 128) * 128)
        tm = min(tm, half)
    return tm


def branch_forward(momenta, params, N, K, dim, *, tm=4096, io_dtype=None):
    """JAX wrapper reproducing branch.forward.

    momenta: (*lead, N, dim) float32
    params:  [(W0, b0), (W1, b1), (W2, b2)] with W: (in, out), b: (1, out)
    returns: (*lead, N, dim, K)
    io_dtype: optional narrower activation I/O dtype (e.g. jnp.bfloat16 on
              v6e/v7x); compute stays f32.
    """
    lead = momenta.shape[:-2]
    B = int(math.prod(lead)) if lead else 1
    in_features = N * dim

    (w0, b0), (w1, b1), (w2, b2) = params
    h0, h1 = w0.shape[1], w1.shape[1]
    out_features = w2.shape[1]

    # Transposed (features x batch) activations; transposed weights/biases.
    z = momenta.reshape(B, in_features)
    zT = z.T                                                # (in_f, B)
    w0t, w1t, w2t = w0.T, w1.T, w2.T                        # (out, in) -- tiny
    b0t, b1t, b2t = b0.T, b1.T, b2.T                        # (out, 1)

    if io_dtype is not None:
        zT = zT.astype(io_dtype)                            # halve activation HBM bytes
    out_dtype = io_dtype if io_dtype is not None else jnp.float32

    tm = _choose_tm(B, tm)
    grid = (pl.cdiv(B, tm),)

    # Streamed activation tiles; VMEM-resident weights/biases (constant index_map).
    x_spec = pl.BlockSpec((in_features, tm), lambda i: (0, i))
    o_spec = pl.BlockSpec((out_features, tm), lambda i: (0, i))

    def resident(shape):
        # TODO(synk): pl.Buffered(1) would drop the redundant second buffer for
        # these constant blocks; skipped as it is a negligible VMEM-hygiene win.
        return pl.BlockSpec(shape, lambda i: (0, 0))

    # VMEM budget: double-buffered activation tiles + (double-buffered) weights.
    in_itemsize = jnp.dtype(zT.dtype).itemsize
    out_itemsize = jnp.dtype(out_dtype).itemsize
    need = (2 * (in_features * tm * in_itemsize + out_features * tm * out_itemsize)
            + 2 * 4 * (w0t.size + b0t.size + w1t.size + b1t.size + w2t.size + b2t.size))
    vmem_limit = int(min(max(2 * need + (4 << 20), 16 << 20), 40 << 20))

    # Advisory cost hint for XLA scheduling around the custom call.
    flops = 2 * B * (in_features * h0 + h0 * h1 + h1 * out_features)
    transcendentals = B * (h0 + h1)
    bytes_accessed = (
        B * (in_features * in_itemsize + out_features * out_itemsize)
        + 4 * (in_features * h0 + h0 + h0 * h1 + h1 + h1 * out_features + out_features)
    )

    outT = pl.pallas_call(
        branch_mlp_kernel,
        out_shape=jax.ShapeDtypeStruct((out_features, B), out_dtype),
        grid=grid,
        in_specs=[
            x_spec,
            resident(w0t.shape), resident(b0t.shape),
            resident(w1t.shape), resident(b1t.shape),
            resident(w2t.shape), resident(b2t.shape),
        ],
        out_specs=o_spec,
        compiler_params=pltpu.CompilerParams(
            dimension_semantics=("parallel",),   # v7x: shard batch grid over 2 TCs
            vmem_limit_bytes=vmem_limit,
        ),
        cost_estimate=pl.CostEstimate(
            flops=flops,
            transcendentals=transcendentals,
            bytes_accessed=bytes_accessed,
        ),
    )(zT, w0t, b0t, w1t, b1t, w2t, b2t)

    # Back to the module's (*lead, N, dim, K) layout.
    return outT.T.reshape(*lead, N, dim, K)


def make_params(key, layer_sizes, N, K, dim):
    """Deterministic xavier-normal weights, zero biases (matches module init).

    PyTorch Linear stores weight as (out, in); we store the transpose (in, out).
    Xavier-normal std is symmetric in (fan_in, fan_out), so the distribution is
    identical.
    """
    sizes = [dim * N] + list(layer_sizes) + [dim * K * N]
    params = []
    for i in range(1, len(sizes)):
        fan_in, fan_out = sizes[i - 1], sizes[i]
        key, sub = jax.random.split(key)
        std = (2.0 / (fan_in + fan_out)) ** 0.5
        w = std * jax.random.normal(sub, (fan_in, fan_out), dtype=jnp.float32)
        b = jnp.zeros((1, fan_out), dtype=jnp.float32)
        params.append((w, b))
    return params


if __name__ == "__main__":
    # Small shapes consistent with the module.
    N, K, dim = 8, 4, 2
    layer_sizes = [32, 32]
    B = 512   # auto-chosen tile -> 2 grid steps (exercises pipelining + v7x split)

    key = jax.random.PRNGKey(0)
    key_p, key_x = jax.random.split(key)
    params = make_params(key_p, layer_sizes, N, K, dim)
    momenta = jax.random.normal(key_x, (B, N, dim), dtype=jnp.float32)

    fwd = jax.jit(functools.partial(branch_forward, N=N, K=K, dim=dim))
    out = fwd(momenta, params)
    jax.block_until_ready(out)

    # Pure-JAX reference of the same math (natural X @ W orientation, highest
    # matmul precision).
    (w0, b0), (w1, b1), (w2, b2) = params
    with jax.default_matmul_precision("highest"):
        z_ref = momenta.reshape(B, N * dim)
        z_ref = jnp.tanh(z_ref @ w0 + b0)
        z_ref = jnp.tanh(z_ref @ w1 + b1)
        z_ref = (z_ref @ w2 + b2).reshape(B, N, dim, K)

    assert out.shape == (B, N, dim, K)
    # Small headroom for MXU precision / accumulation-order differences between
    # the transposed in-kernel evaluation and the XLA reference; structural
    # errors would be O(0.1-1).
    assert jnp.allclose(out, z_ref, atol=5e-3, rtol=5e-3), float(
        jnp.max(jnp.abs(out - z_ref)))

    print("KERNEL_OK")
</pallas_src>

<mosaic_0001>
module attributes {stable_mosaic.version = 11 : i64} {
  func.func @branch_mlp_kernel(%arg0: i32, %arg1: memref<16x256xf32, #tpu.memory_space<vmem>>, %arg2: memref<32x16xf32, #tpu.memory_space<vmem>>, %arg3: memref<32x1xf32, #tpu.memory_space<vmem>>, %arg4: memref<32x32xf32, #tpu.memory_space<vmem>>, %arg5: memref<32x1xf32, #tpu.memory_space<vmem>>, %arg6: memref<64x32xf32, #tpu.memory_space<vmem>>, %arg7: memref<64x1xf32, #tpu.memory_space<vmem>>, %arg8: memref<64x256xf32, #tpu.memory_space<vmem>>) attributes {dimension_semantics = [#tpu.dimension_semantics<parallel>], iteration_bounds = array<i64: 2>, scalar_prefetch = 0 : i64, scratch_operands = 0 : i64, tpu.core_type = #tpu.core_type<tc>, window_params = [{transform_indices = @transform_0, window_bounds = array<i64: 16, 256>}, {pipeline_mode = #tpu.pipeline_mode<synchronous>, transform_indices = @transform_1, window_bounds = array<i64: 32, 16>}, {pipeline_mode = #tpu.pipeline_mode<synchronous>, transform_indices = @transform_2, window_bounds = array<i64: 32, 1>}, {pipeline_mode = #tpu.pipeline_mode<synchronous>, transform_indices = @transform_3, window_bounds = array<i64: 32, 32>}, {pipeline_mode = #tpu.pipeline_mode<synchronous>, transform_indices = @transform_4, window_bounds = array<i64: 32, 1>}, {pipeline_mode = #tpu.pipeline_mode<synchronous>, transform_indices = @transform_5, window_bounds = array<i64: 64, 32>}, {pipeline_mode = #tpu.pipeline_mode<synchronous>, transform_indices = @transform_6, window_bounds = array<i64: 64, 1>}, {transform_indices = @transform_7, window_bounds = array<i64: 64, 256>}]} {
    %c0 = arith.constant 0 : index
    %c0_0 = arith.constant 0 : index
    %0 = vector.load %arg1[%c0, %c0_0] : memref<16x256xf32, #tpu.memory_space<vmem>>, vector<16x256xf32>
    %c0_1 = arith.constant 0 : index
    %c0_2 = arith.constant 0 : index
    %1 = vector.load %arg2[%c0_1, %c0_2] : memref<32x16xf32, #tpu.memory_space<vmem>>, vector<32x16xf32>
    %cst = arith.constant dense<0.000000e+00> : vector<32x256xf32>
    %2 = tpu.matmul %1, %0, %cst {dimension_numbers = #tpu.dot_dimension_numbers<[1], [0], [0], [1], [0, 0, 1, 1], [], []>} : vector<32x16xf32>, vector<16x256xf32>, vector<32x256xf32> -> vector<32x256xf32>
    %c0_3 = arith.constant 0 : index
    %c0_4 = arith.constant 0 : index
    %3 = vector.load %arg3[%c0_3, %c0_4] : memref<32x1xf32, #tpu.memory_space<vmem>>, vector<32x1xf32>
    %4 = vector.broadcast %3 : vector<32x1xf32> to vector<32x256xf32>
    %5 = arith.addf %2, %4 : vector<32x256xf32>
    %6 = math.tanh %5 : vector<32x256xf32>
    %c0_5 = arith.constant 0 : index
    %c0_6 = arith.constant 0 : index
    %7 = vector.load %arg4[%c0_5, %c0_6] : memref<32x32xf32, #tpu.memory_space<vmem>>, vector<32x32xf32>
    %cst_7 = arith.constant dense<0.000000e+00> : vector<32x256xf32>
    %8 = tpu.matmul %7, %6, %cst_7 {dimension_numbers = #tpu.dot_dimension_numbers<[1], [0], [0], [1], [0, 0, 1, 1], [], []>} : vector<32x32xf32>, vector<32x256xf32>, vector<32x256xf32> -> vector<32x256xf32>
    %c0_8 = arith.constant 0 : index
    %c0_9 = arith.constant 0 : index
    %9 = vector.load %arg5[%c0_8, %c0_9] : memref<32x1xf32, #tpu.memory_space<vmem>>, vector<32x1xf32>
    %10 = vector.broadcast %9 : vector<32x1xf32> to vector<32x256xf32>
    %11 = arith.addf %8, %10 : vector<32x256xf32>
    %12 = math.tanh %11 : vector<32x256xf32>
    %c0_10 = arith.constant 0 : index
    %c0_11 = arith.constant 0 : index
    %13 = vector.load %arg6[%c0_10, %c0_11] : memref<64x32xf32, #tpu.memory_space<vmem>>, vector<64x32xf32>
    %cst_12 = arith.constant dense<0.000000e+00> : vector<64x256xf32>
    %14 = tpu.matmul %13, %12, %cst_12 {dimension_numbers = #tpu.dot_dimension_numbers<[1], [0], [0], [1], [0, 0, 1, 1], [], []>} : vector<64x32xf32>, vector<32x256xf32>, vector<64x256xf32> -> vector<64x256xf32>
    %c0_13 = arith.constant 0 : index
    %c0_14 = arith.constant 0 : index
    %15 = vector.load %arg7[%c0_13, %c0_14] : memref<64x1xf32, #tpu.memory_space<vmem>>, vector<64x1xf32>
    %16 = vector.broadcast %15 : vector<64x1xf32> to vector<64x256xf32>
    %17 = arith.addf %14, %16 : vector<64x256xf32>
    %c0_15 = arith.constant 0 : index
    %c0_16 = arith.constant 0 : index
    %18 = vector.load %arg8[%c0_15, %c0_16] : memref<64x256xf32, #tpu.memory_space<vmem>>, vector<64x256xf32>
    tpu.vector_store %arg8[%c0_15, %c0_16], %17 {strides = array<i32>} : memref<64x256xf32, #tpu.memory_space<vmem>>, vector<64x256xf32>,
    return
  }
  func.func @transform_0(%arg0: i32) -> (i32, i32) {
    %c0_i32 = arith.constant 0 : i32
    %c0_i32_0 = arith.constant 0 : i32
    return %c0_i32, %arg0 : i32, i32
  }
  func.func @transform_1(%arg0: i32) -> (i32, i32) {
    %c0_i32 = arith.constant 0 : i32
    %c0_i32_0 = arith.constant 0 : i32
    %c0_i32_1 = arith.constant 0 : i32
    return %c0_i32, %c0_i32_0 : i32, i32
  }
  func.func @transform_2(%arg0: i32) -> (i32, i32) {
    %c0_i32 = arith.constant 0 : i32
    %c0_i32_0 = arith.constant 0 : i32
    %c0_i32_1 = arith.constant 0 : i32
    return %c0_i32, %c0_i32_0 : i32, i32
  }
  func.func @transform_3(%arg0: i32) -> (i32, i32) {
    %c0_i32 = arith.constant 0 : i32
    %c0_i32_0 = arith.constant 0 : i32
    %c0_i32_1 = arith.constant 0 : i32
    return %c0_i32, %c0_i32_0 : i32, i32
  }
  func.func @transform_4(%arg0: i32) -> (i32, i32) {
    %c0_i32 = arith.constant 0 : i32
    %c0_i32_0 = arith.constant 0 : i32
    %c0_i32_1 = arith.constant 0 : i32
    return %c0_i32, %c0_i32_0 : i32, i32
  }
  func.func @transform_5(%arg0: i32) -> (i32, i32) {
    %c0_i32 = arith.constant 0 : i32
    %c0_i32_0 = arith.constant 0 : i32
    %c0_i32_1 = arith.constant 0 : i32
    return %c0_i32, %c0_i32_0 : i32, i32
  }
  func.func @transform_6(%arg0: i32) -> (i32, i32) {
    %c0_i32 = arith.constant 0 : i32
    %c0_i32_0 = arith.constant 0 : i32
    %c0_i32_1 = arith.constant 0 : i32
    return %c0_i32, %c0_i32_0 : i32, i32
  }
  func.func @transform_7(%arg0: i32) -> (i32, i32) {
    %c0_i32 = arith.constant 0 : i32
    %c0_i32_0 = arith.constant 0 : i32
    return %c0_i32, %arg0 : i32, i32
  }
}

</mosaic_0001>

<llo_original>
// kernel: branch_forward.1
$region0: #{branch_forward.1}
  #allocation0 [shape = 'u32[]', space=smem, size = 0x4, offset = 0x4, fixed_abs, tag = 'smem constant byte address 0x4 - core index']
  #allocation1 [shape = 'u32[72,128]{1,0:T(1,128)}', space=vmem, size = 0x9000, scoped, tag = 'internal scratch']
  %s0 = inlined_call_operand.vmem [shape: f32[16,512], index: 0, kind: input, shape index: {}]
  %s1 = inlined_call_operand.vmem [shape: f32[32,16], index: 1, kind: input, shape index: {}]
  %s2 = inlined_call_operand.vmem [shape: f32[32,1], index: 2, kind: input, shape index: {}]
  %s3 = inlined_call_operand.vmem [shape: f32[32,32], index: 3, kind: input, shape index: {}]
  %s4 = inlined_call_operand.vmem [shape: f32[32,1], index: 4, kind: input, shape index: {}]
  %s5 = inlined_call_operand.vmem [shape: f32[64,32], index: 5, kind: input, shape index: {}]
  %s6 = inlined_call_operand.vmem [shape: f32[64,1], index: 6, kind: input, shape index: {}]
  %s7 = inlined_call_operand.vmem [shape: f32[64,512], index: 7, kind: output, shape index: {}]
  %s8 = sld [smem:[#allocation0]]
  $region103: #{branch_forward.1} parent=0
    _
  %s10 = ssub.s32 1, %s8
  %s11 = scalar_select 0, %s10, %s8
  $region1: #{branch_forward.1} parent=0
    #allocation2 [shape = 'u8[32768]{0}', space=vmem, size = 0x8000, scoped, tag = 'input window, operand 0']
    #allocation3 [shape = 'u8[131072]{0}', space=vmem, size = 0x20000, scoped, tag = 'output window, operand 0']
    loop: start=0, step=1, limit=4
    $region2: #{branch_forward.1} parent=1 // loop_pre_header
      _
    $region3: #{branch_forward.1} parent=1 // loop_header
      %s13 = sphi 0, %s17
      %p14 = scmp.ge.s32.totalorder %s13, 4
      %s23 = sphi 0, %s25
      %s26 = sphi 0, %s23
      %s27 = sphi 0, %s26
      %s43 = sphi 0, %s27
      %s47 = sphi 0, %s47
      %s49 = sphi 0, %s47
      %s50 = sphi 0, %s49
      %s64 = sphi 0, %s50
      %s68 = sphi 0, %s68
      %s70 = sphi 0, %s68
      %s71 = sphi 0, %s70
      %s85 = sphi 0, %s71
      %s89 = sphi 0, %s89
      %s91 = sphi 0, %s89
      %s92 = sphi 0, %s91
      %s106 = sphi 0, %s92
      %s110 = sphi 0, %s110
      %s112 = sphi 0, %s110
      %s113 = sphi 0, %s112
      %s127 = sphi 0, %s113
      %s131 = sphi 0, %s131
      %s133 = sphi 0, %s131
      %s134 = sphi 0, %s133
      %s148 = sphi 0, %s134
      %s152 = sphi 0, %s152
      %s154 = sphi 0, %s152
      %s155 = sphi 0, %s154
      %s169 = sphi 0, %s155
      %s175 = sphi 0, %s177
      %s178 = sphi 0, %s175
      %s179 = sphi 0, %s178
      %s195 = sphi 0, %s179
    $region4: #{branch_forward.1} parent=1 // loop_header_branch
      %16 = sbr.rel (%p14) target = $region8
    $region5: #{branch_forward.1} parent=1 // loop_body
      %s18 = ssub.s32 %s13, 1
      %s19 = ssub.s32 %s13, 2
      %s20 = sadd.s32 %s13, 1
      %s21 = ssub.s32 %s13, %s20
      %p22 = scmp.eq.s32.totalorder %s21, 0
      %s24 = sadd.s32 %s23, 1
      %s25 = scalar_select %p22, %s23, %s24
      %p28 = pneg %p22
      %p29 = scmp.eq.s32.totalorder %s13, 1
      %p30 = por %p28, %p29
      %p31 = scmp.ne.s32.totalorder %s23, %s26
      %p32 = scmp.eq.s32.totalorder %s13, 0
      %p33 = por %p31, %p32
      %p34 = scmp.ne.s32.totalorder %s23, %s26
      %p35 = scmp.eq.s32.totalorder %s18, 1
      %p36 = por %p34, %p35
      %p37 = scmp.ne.s32.totalorder %s26, %s27
      %p38 = scmp.eq.s32.totalorder %s18, 0
      %p39 = por %p37, %p38
      %p40 = scmp.ne.s32.totalorder %s26, %s27
      %p41 = scmp.eq.s32.totalorder %s19, 1
      %p42 = por %p40, %p41
      %p44 = scmp.ne.s32.totalorder %s27, %s43
      %p45 = scmp.eq.s32.totalorder %s19, 0
      %p46 = por %p44, %p45
      %s48 = sadd.s32 %s47, 1
      %p51 = scmp.eq.s32.totalorder %s13, 1
      %p52 = scmp.ne.s32.totalorder %s47, %s49
      %p53 = scmp.eq.s32.totalorder %s13, 0
      %p54 = por %p52, %p53
      %p55 = scmp.ne.s32.totalorder %s47, %s49
      %p56 = scmp.eq.s32.totalorder %s18, 1
      %p57 = por %p55, %p56
      %p58 = scmp.ne.s32.totalorder %s49, %s50
      %p59 = scmp.eq.s32.totalorder %s18, 0
      %p60 = por %p58, %p59
      %p61 = scmp.ne.s32.totalorder %s49, %s50
      %p62 = scmp.eq.s32.totalorder %s19, 1
      %p63 = por %p61, %p62
      %p65 = scmp.ne.s32.totalorder %s50, %s64
      %p66 = scmp.eq.s32.totalorder %s19, 0
      %p67 = por %p65, %p66
      %s69 = sadd.s32 %s68, 1
      %p72 = scmp.eq.s32.totalorder %s13, 1
      %p73 = scmp.ne.s32.totalorder %s68, %s70
      %p74 = scmp.eq.s32.totalorder %s13, 0
      %p75 = por %p73, %p74
      %p76 = scmp.ne.s32.totalorder %s68, %s70
      %p77 = scmp.eq.s32.totalorder %s18, 1
      %p78 = por %p76, %p77
      %p79 = scmp.ne.s32.totalorder %s70, %s71
      %p80 = scmp.eq.s32.totalorder %s18, 0
      %p81 = por %p79, %p80
      %p82 = scmp.ne.s32.totalorder %s70, %s71
      %p83 = scmp.eq.s32.totalorder %s19, 1
      %p84 = por %p82, %p83
      %p86 = scmp.ne.s32.totalorder %s71, %s85
      %p87 = scmp.eq.s32.totalorder %s19, 0
      %p88 = por %p86, %p87
      %s90 = sadd.s32 %s89, 1
      %p93 = scmp.eq.s32.totalorder %s13, 1
      %p94 = scmp.ne.s32.totalorder %s89, %s91
      %p95 = scmp.eq.s32.totalorder %s13, 0
      %p96 = por %p94, %p95
      %p97 = scmp.ne.s32.totalorder %s89, %s91
      %p98 = scmp.eq.s32.totalorder %s18, 1
      %p99 = por %p97, %p98
      %p100 = scmp.ne.s32.totalorder %s91, %s92
      %p101 = scmp.eq.s32.totalorder %s18, 0
      %p102 = por %p100, %p101
      %p103 = scmp.ne.s32.totalorder %s91, %s92
      %p104 = scmp.eq.s32.totalorder %s19, 1
      %p105 = por %p103, %p104
      %p107 = scmp.ne.s32.totalorder %s92, %s106
      %p108 = scmp.eq.s32.totalorder %s19, 0
      %p109 = por %p107, %p108
      %s111 = sadd.s32 %s110, 1
      %p114 = scmp.eq.s32.totalorder %s13, 1
      %p115 = scmp.ne.s32.totalorder %s110, %s112
      %p116 = scmp.eq.s32.totalorder %s13, 0
      %p117 = por %p115, %p116
      %p118 = scmp.ne.s32.totalorder %s110, %s112
      %p119 = scmp.eq.s32.totalorder %s18, 1
      %p120 = por %p118, %p119
      %p121 = scmp.ne.s32.totalorder %s112, %s113
      %p122 = scmp.eq.s32.totalorder %s18, 0
      %p123 = por %p121, %p122
      %p124 = scmp.ne.s32.totalorder %s112, %s113
      %p125 = scmp.eq.s32.totalorder %s19, 1
      %p126 = por %p124, %p125
      %p128 = scmp.ne.s32.totalorder %s113, %s127
      %p129 = scmp.eq.s32.totalorder %s19, 0
      %p130 = por %p128, %p129
      %s132 = sadd.s32 %s131, 1
      %p135 = scmp.eq.s32.totalorder %s13, 1
      %p136 = scmp.ne.s32.totalorder %s131, %s133
      %p137 = scmp.eq.s32.totalorder %s13, 0
      %p138 = por %p136, %p137
      %p139 = scmp.ne.s32.totalorder %s131, %s133
      %p140 = scmp.eq.s32.totalorder %s18, 1
      %p141 = por %p139, %p140
      %p142 = scmp.ne.s32.totalorder %s133, %s134
      %p143 = scmp.eq.s32.totalorder %s18, 0
      %p144 = por %p142, %p143
      %p145 = scmp.ne.s32.totalorder %s133, %s134
      %p146 = scmp.eq.s32.totalorder %s19, 1
      %p147 = por %p145, %p146
      %p149 = scmp.ne.s32.totalorder %s134, %s148
      %p150 = scmp.eq.s32.totalorder %s19, 0
      %p151 = por %p149, %p150
      %s153 = sadd.s32 %s152, 1
      %p156 = scmp.eq.s32.totalorder %s13, 1
      %p157 = scmp.ne.s32.totalorder %s152, %s154
      %p158 = scmp.eq.s32.totalorder %s13, 0
      %p159 = por %p157, %p158
      %p160 = scmp.ne.s32.totalorder %s152, %s154
      %p161 = scmp.eq.s32.totalorder %s18, 1
      %p162 = por %p160, %p161
      %p163 = scmp.ne.s32.totalorder %s154, %s155
      %p164 = scmp.eq.s32.totalorder %s18, 0
      %p165 = por %p163, %p164
      %p166 = scmp.ne.s32.totalorder %s154, %s155
      %p167 = scmp.eq.s32.totalorder %s19, 1
      %p168 = por %p166, %p167
      %p170 = scmp.ne.s32.totalorder %s155, %s169
      %p171 = scmp.eq.s32.totalorder %s19, 0
      %p172 = por %p170, %p171
      %s173 = ssub.s32 %s13, %s20
      %p174 = scmp.eq.s32.totalorder %s173, 0
      %s176 = sadd.s32 %s175, 1
      %s177 = scalar_select %p174, %s175, %s176
      %p180 = pneg %p174
      %p181 = scmp.eq.s32.totalorder %s13, 1
      %p182 = por %p180, %p181
      %p183 = scmp.ne.s32.totalorder %s175, %s178
      %p184 = scmp.eq.s32.totalorder %s13, 0
      %p185 = por %p183, %p184
      %p186 = scmp.ne.s32.totalorder %s175, %s178
      %p187 = scmp.eq.s32.totalorder %s18, 1
      %p188 = por %p186, %p187
      %p189 = scmp.ne.s32.totalorder %s178, %s179
      %p190 = scmp.eq.s32.totalorder %s18, 0
      %p191 = por %p189, %p190
      %p192 = scmp.ne.s32.totalorder %s178, %s179
      %p193 = scmp.eq.s32.totalorder %s19, 1
      %p194 = por %p192, %p193
      %p196 = scmp.ne.s32.totalorder %s179, %s195
      %p197 = scmp.eq.s32.totalorder %s19, 0
      %p198 = por %p196, %p197
      %p199 = scmp.le.s32.totalorder 1, %s13
      %p200 = scmp.lt.s32.totalorder %s13, 3
      %p201 = pnand %p199, %p200
      %p202 = pneg %p201
      // Predicated region
      $region9: #{branch_forward.1} parent=5 // pred_check
        _
      $region10: #{branch_forward.1} parent=5 // pred_check_branch
        %204 = sbr.rel (%p201) target = $region12
      $region11: #{branch_forward.1} parent=5 // pred_region
        %s205 = ssub.s32 %s13, 1
        // Predicated region
        $region13: #{branch_forward.1} parent=11 // pred_check
          %p206 = pneg %p60
        $region14: #{branch_forward.1} parent=11 // pred_check_branch
          %208 = sbr.rel (%p206) target = $region16
        $region15: #{branch_forward.1} parent=11 // pred_region
          _
        $region16: #{branch_forward.1} parent=11 // pred_fallthru
          _
        // Predicated region
        $region17: #{branch_forward.1} parent=11 // pred_check
          %p209 = pneg %p81
        $region18: #{branch_forward.1} parent=11 // pred_check_branch
          %211 = sbr.rel (%p209) target = $region20
        $region19: #{branch_forward.1} parent=11 // pred_region
          _
        $region20: #{branch_forward.1} parent=11 // pred_fallthru
          _
        // Predicated region
        $region21: #{branch_forward.1} parent=11 // pred_check
          %p212 = pneg %p102
        $region22: #{branch_forward.1} parent=11 // pred_check_branch
          %214 = sbr.rel (%p212) target = $region24
        $region23: #{branch_forward.1} parent=11 // pred_region
          _
        $region24: #{branch_forward.1} parent=11 // pred_fallthru
          _
        // Predicated region
        $region25: #{branch_forward.1} parent=11 // pred_check
          %p215 = pneg %p123
        $region26: #{branch_forward.1} parent=11 // pred_check_branch
          %217 = sbr.rel (%p215) target = $region28
        $region27: #{branch_forward.1} parent=11 // pred_region
          _
        $region28: #{branch_forward.1} parent=11 // pred_fallthru
          _
        // Predicated region
        $region29: #{branch_forward.1} parent=11 // pred_check
          %p218 = pneg %p144
        $region30: #{branch_forward.1} parent=11 // pred_check_branch
          %220 = sbr.rel (%p218) target = $region32
        $region31: #{branch_forward.1} parent=11 // pred_region
          _
        $region32: #{branch_forward.1} parent=11 // pred_fallthru
          _
        // Predicated region
        $region33: #{branch_forward.1} parent=11 // pred_check
          %p221 = pneg %p165
        $region34: #{branch_forward.1} parent=11 // pred_check_branch
          %223 = sbr.rel (%p221) target = $region36
        $region35: #{branch_forward.1} parent=11 // pred_region
          _
        $region36: #{branch_forward.1} parent=11 // pred_fallthru
          _
      $region12: #{branch_forward.1} parent=5 // pred_fallthru
        _
      %p224 = scmp.lt.s32.totalorder %s13, 2
      // Predicated region
      $region37: #{branch_forward.1} parent=5 // pred_check
        %p225 = pneg %p224
      $region38: #{branch_forward.1} parent=5 // pred_check_branch
        %227 = sbr.rel (%p225) target = $region40
      $region39: #{branch_forward.1} parent=5 // pred_region
        // Predicated region
        $region41: #{branch_forward.1} parent=39 // pred_check
          %p228 = pneg %p33
        $region42: #{branch_forward.1} parent=39 // pred_check_branch
          %230 = sbr.rel (%p228) target = $region44
        $region43: #{branch_forward.1} parent=39 // pred_region
          %s231 = sand.u32 %s23, 1
          %s232 = sand.u32 %s23, 1
          %s233 = smul.addr %s232, 32
          %s234 = scalar_lea.vmem [#allocation2], %s233
          %s235 = smul.u32 2, %s13
          %s236 = smul.addr %s235, 8
          %s237 = scalar_lea.vmem %s0, %s236
          // Predicated region
          $region45: #{branch_forward.1} parent=43 // pred_check
            _
          $region46: #{branch_forward.1} parent=43 // pred_check_branch
            %239 = sbr.rel (0) target = $region48
          $region47: #{branch_forward.1} parent=43 // pred_region
            // Predicated region
            $region49: #{branch_forward.1} parent=47 // pred_check
              _
            $region50: #{branch_forward.1} parent=47 // pred_check_branch
              %241 = sbr.rel (0) target = $region52
            $region51: #{branch_forward.1} parent=47 // pred_region
              loop: start=0, step=1, limit=1
              $region53: #{branch_forward.1} parent=51 // loop_pre_header
                _
              $region54: #{branch_forward.1} parent=51 // loop_header
                %s243 = sphi 0, %s247
                %p244 = scmp.ge.s32.totalorder %s243, 1
                %s248 = sphi %s237, %s237
                %s249 = sphi %s234, %s234
              $region55: #{branch_forward.1} parent=51 // loop_header_branch
                %246 = sbr.rel (%p244) target = $region59
              $region56: #{branch_forward.1} parent=51 // loop_body
                %v250 = vld [vmem:[%s248] sm:$0xff]
                %251 = vst [vmem:[%s249] sm:$0xff] %v250
                %v252 = vld [vmem:[%s248 + $0x8] sm:$0xff]
                %253 = vst [vmem:[%s249 + $0x8] sm:$0xff] %v252
                %v254 = vld [vmem:[%s248 + $0x20] sm:$0xff]
                %255 = vst [vmem:[%s249 + $0x10] sm:$0xff] %v254
                %v256 = vld [vmem:[%s248 + $0x28] sm:$0xff]
                %257 = vst [vmem:[%s249 + $0x18] sm:$0xff] %v256
              $region57: #{branch_forward.1} parent=51 // loop_footer
                %s247 = sadd.s32 1, %s243
              $region58: #{branch_forward.1} parent=51 // loop_footer_branch
                %242 = sbr.rel target = $region54
              $region59: #{branch_forward.1} parent=51 // loop_exit
                _
            $region52: #{branch_forward.1} parent=47 // pred_fallthru
              _
            // Predicated region
            $region60: #{branch_forward.1} parent=47 // pred_check
              _
            $region61: #{branch_forward.1} parent=47 // pred_check_branch
              %259 = sbr.rel target = $region63
            $region62: #{branch_forward.1} parent=47 // pred_region
              _
            $region63: #{branch_forward.1} parent=47 // pred_fallthru
              _
          $region48: #{branch_forward.1} parent=43 // pred_fallthru
            _
          %260 = vnop
        $region44: #{branch_forward.1} parent=39 // pred_fallthru
          _
      $region40: #{branch_forward.1} parent=5 // pred_fallthru
        _
      %p261 = scmp.le.s32.totalorder 1, %s13
      %p262 = scmp.lt.s32.totalorder %s13, 3
      %p263 = pnand %p261, %p262
      %p264 = pneg %p263
      // Predicated region
      $region64: #{branch_forward.1} parent=5 // pred_check
        _
      $region65: #{branch_forward.1} parent=5 // pred_check_branch
        %266 = sbr.rel (%p263) target = $region67
      $region66: #{branch_forward.1} parent=5 // pred_region
        %s267 = ssub.s32 %s13, 1
        %s268 = sand.u32 %s26, 1
        %s269 = sand.u32 %s26, 1
        %s270 = smul.addr %s269, 32
        %s271 = scalar_lea.vmem [#allocation2], %s270
        // Predicated region
        $region68: #{branch_forward.1} parent=66 // pred_check
          %p272 = pneg %p39
        $region69: #{branch_forward.1} parent=66 // pred_check_branch
          %274 = sbr.rel (%p272) target = $region71
        $region70: #{branch_forward.1} parent=66 // pred_region
          _
        $region71: #{branch_forward.1} parent=66 // pred_fallthru
          _
        %s275 = sand.u32 %s26, 1
        %s276 = sand.u32 %s26, 1
        %s277 = smul.addr %s276, 32
        %s278 = scalar_lea.vmem [#allocation2], %s277
        %p279 = pneg %p39
        %p280 = pneg %p36
        %p281 = pneg %p60
        %p282 = pneg %p57
        %p283 = pneg %p81
        %p284 = pneg %p78
        %p285 = pneg %p102
        %p286 = pneg %p99
        %p287 = pneg %p123
        %p288 = pneg %p120
        %p289 = pneg %p144
        %p290 = pneg %p141
        %p291 = pneg %p165
        %p292 = pneg %p162
        %p293 = pneg %p191
        %p294 = pneg %p188
        %s295 = sand.u32 %s178, 1
        %s296 = sand.u32 %s178, 1
        %s297 = smul.addr %s296, 128
        %s298 = scalar_lea.vmem [#allocation3], %s297
        %s299 = smul.u32 2, %s18
        %s300 = smul.u32 2, %s18
        %v301 = vld [vmem:[%s271] sm:$0xff]
        %v302 = vld [vmem:[%s271 + $0x8] sm:$0xff]
        %v303 = vld [vmem:[%s271 + $0x10] sm:$0xff]
        %v304 = vld [vmem:[%s271 + $0x18] sm:$0xff]
        %v305 = vld [vmem:[%s1] sm:$0xff]
        %v306 = vld [vmem:[%s1 + $0x8] sm:$0xff]
        %v307 = vld [vmem:[%s1 + $0x10] sm:$0xff]
        %v308 = vld [vmem:[%s1 + $0x18] sm:$0xff]
        %v309 = vld [vmem:[%s2] sm:$0xff]
        %v310 = vld [vmem:[%s2 + $0x8] sm:$0xff]
        %v311 = vld [vmem:[%s2 + $0x10] sm:$0xff]
        %v312 = vld [vmem:[%s2 + $0x18] sm:$0xff]
        %314 = vset.pattern.permute.xlu0 0
        %315 = vperm.xlu0 %314, %v309
        %v316 = vpop.permute.xlu0 %315
        %319 = vset.pattern.permute.xlu0 0
        %320 = vperm.xlu0 %319, %v310
        %v321 = vpop.permute.xlu0 %320
        %324 = vset.pattern.permute.xlu0 0
        %325 = vperm.xlu0 %324, %v311
        %v326 = vpop.permute.xlu0 %325
        %329 = vset.pattern.permute.xlu0 0
        %330 = vperm.xlu0 %329, %v312
        %v331 = vpop.permute.xlu0 %330
        %vm333 = vcmask 130048
        %v335 = vsel %vm333, %v305, 0
        %v338 = vsel %vm333, %v306, 0
        %v341 = vsel %vm333, %v307, 0
        %v344 = vsel %vm333, %v308, 0
        %346 = vmatpush.msra.mxu0 0.0
        %347 = vmatpush.msra.mxu0 0.0
        %348 = vmatpush.msra.mxu0 0.0
        %349 = vmatpush.msra.mxu0 0.0
        %350 = vmatpush.msra.mxu0 0.0
        %351 = vmatpush.msra.mxu0 0.0
        %352 = vmatpush.msra.mxu0 0.0
        %353 = vmatpush.msra.mxu0 0.0
        %354 = vmatpush.msra.mxu0 0.0
        %355 = vmatpush.msra.mxu0 0.0
        %356 = vmatpush.msra.mxu0 0.0
        %357 = vmatpush.msra.mxu0 0.0
        %358 = vmatpush.msra.mxu0 0.0
        %359 = vmatpush.msra.mxu0 0.0
        %360 = vmatpush.msra.mxu0 %v303
        %361 = vmatpush.msra.mxu0 %v301
        %362 = vmatmul.f32.gmra.mxu0 %v335
        %v363 = vpop.f32.mrf.mxu0
        %v364 = vadd.f32 %v316, %v363
        %365 = vmatmul.f32.gmra.mxu0 %v338
        %v366 = vpop.f32.mrf.mxu0
        %v367 = vadd.f32 %v321, %v366
        %368 = vmatmul.f32.gmra.mxu0 %v341
        %v369 = vpop.f32.mrf.mxu0
        %v370 = vadd.f32 %v326, %v369
        %371 = vmatmul.f32.gmra.mxu0 %v344
        %v372 = vpop.f32.mrf.mxu0
        %v373 = vadd.f32 %v331, %v372
        %374 = vdwg.mxu0
        %375 = vmatpush.msra.mxu0 0.0
        %376 = vmatpush.msra.mxu0 0.0
        %377 = vmatpush.msra.mxu0 0.0
        %378 = vmatpush.msra.mxu0 0.0
        %379 = vmatpush.msra.mxu0 0.0
        %380 = vmatpush.msra.mxu0 0.0
        %381 = vmatpush.msra.mxu0 0.0
        %382 = vmatpush.msra.mxu0 0.0
        %383 = vmatpush.msra.mxu0 0.0
        %384 = vmatpush.msra.mxu0 0.0
        %385 = vmatpush.msra.mxu0 0.0
        %386 = vmatpush.msra.mxu0 0.0
        %387 = vmatpush.msra.mxu0 0.0
        %388 = vmatpush.msra.mxu0 0.0
        %389 = vmatpush.msra.mxu0 %v304
        %390 = vmatpush.msra.mxu0 %v302
        %391 = vmatmul.f32.gmra.mxu0 %v335
        %v392 = vpop.f32.mrf.mxu0
        %v393 = vadd.f32 %v316, %v392
        %394 = vmatmul.f32.gmra.mxu0 %v338
        %v395 = vpop.f32.mrf.mxu0
        %v396 = vadd.f32 %v321, %v395
        %397 = vmatmul.f32.gmra.mxu0 %v341
        %v398 = vpop.f32.mrf.mxu0
        %v399 = vadd.f32 %v326, %v398
        %400 = vmatmul.f32.gmra.mxu0 %v344
        %v401 = vpop.f32.mrf.mxu0
        %v402 = vadd.f32 %v331, %v401
        %403 = vdwg.mxu0
        %v404 = vtanh.pop %v364
        %v405 = vtanh.pop %v393
        %v406 = vtanh.pop %v367
        %v407 = vtanh.pop %v396
        %v408 = vtanh.pop %v370
        %v409 = vtanh.pop %v399
        %v410 = vtanh.pop %v373
        %v411 = vtanh.pop %v402
        %v412 = vld [vmem:[%s3] sm:$0xff]
        %v413 = vld [vmem:[%s3 + $0x8] sm:$0xff]
        %v414 = vld [vmem:[%s3 + $0x10] sm:$0xff]
        %v415 = vld [vmem:[%s3 + $0x18] sm:$0xff]
        %v416 = vld [vmem:[%s4] sm:$0xff]
        %v417 = vld [vmem:[%s4 + $0x8] sm:$0xff]
        %v418 = vld [vmem:[%s4 + $0x10] sm:$0xff]
        %v419 = vld [vmem:[%s4 + $0x18] sm:$0xff]
        %421 = vset.pattern.permute.xlu0 0
        %422 = vperm.xlu0 %421, %v416
        %v423 = vpop.permute.xlu0 %422
        %426 = vset.pattern.permute.xlu0 0
        %427 = vperm.xlu0 %426, %v417
        %v428 = vpop.permute.xlu0 %427
        %431 = vset.pattern.permute.xlu0 0
        %432 = vperm.xlu0 %431, %v418
        %v433 = vpop.permute.xlu0 %432
        %436 = vset.pattern.permute.xlu0 0
        %437 = vperm.xlu0 %436, %v419
        %v438 = vpop.permute.xlu0 %437
        %vm440 = vcmask 261120
        %v442 = vsel %vm440, %v412, 0
        %v445 = vsel %vm440, %v413, 0
        %v448 = vsel %vm440, %v414, 0
        %v451 = vsel %vm440, %v415, 0
        %453 = vmatpush.msra.mxu0 0.0
        %454 = vmatpush.msra.mxu0 0.0
        %455 = vmatpush.msra.mxu0 0.0
        %456 = vmatpush.msra.mxu0 0.0
        %457 = vmatpush.msra.mxu0 0.0
        %458 = vmatpush.msra.mxu0 0.0
        %459 = vmatpush.msra.mxu0 0.0
        %460 = vmatpush.msra.mxu0 0.0
        %461 = vmatpush.msra.mxu0 0.0
        %462 = vmatpush.msra.mxu0 0.0
        %463 = vmatpush.msra.mxu0 0.0
        %464 = vmatpush.msra.mxu0 0.0
        %465 = vmatpush.msra.mxu0 %v410
        %466 = vmatpush.msra.mxu0 %v408
        %467 = vmatpush.msra.mxu0 %v406
        %468 = vmatpush.msra.mxu0 %v404
        %469 = vmatmul.f32.gmra.mxu0 %v442
        %v470 = vpop.f32.mrf.mxu0
        %v471 = vadd.f32 %v423, %v470
        %472 = vmatmul.f32.gmra.mxu0 %v445
        %v473 = vpop.f32.mrf.mxu0
        %v474 = vadd.f32 %v428, %v473
        %475 = vmatmul.f32.gmra.mxu0 %v448
        %v476 = vpop.f32.mrf.mxu0
        %v477 = vadd.f32 %v433, %v476
        %478 = vmatmul.f32.gmra.mxu0 %v451
        %v479 = vpop.f32.mrf.mxu0
        %v480 = vadd.f32 %v438, %v479
        %481 = vdwg.mxu0
        %482 = vmatpush.msra.mxu0 0.0
        %483 = vmatpush.msra.mxu0 0.0
        %484 = vmatpush.msra.mxu0 0.0
        %485 = vmatpush.msra.mxu0 0.0
        %486 = vmatpush.msra.mxu0 0.0
        %487 = vmatpush.msra.mxu0 0.0
        %488 = vmatpush.msra.mxu0 0.0
        %489 = vmatpush.msra.mxu0 0.0
        %490 = vmatpush.msra.mxu0 0.0
        %491 = vmatpush.msra.mxu0 0.0
        %492 = vmatpush.msra.mxu0 0.0
        %493 = vmatpush.msra.mxu0 0.0
        %494 = vmatpush.msra.mxu0 %v411
        %495 = vmatpush.msra.mxu0 %v409
        %496 = vmatpush.msra.mxu0 %v407
        %497 = vmatpush.msra.mxu0 %v405
        %498 = vmatmul.f32.gmra.mxu0 %v442
        %v499 = vpop.f32.mrf.mxu0
        %v500 = vadd.f32 %v423, %v499
        %501 = vmatmul.f32.gmra.mxu0 %v445
        %v502 = vpop.f32.mrf.mxu0
        %v503 = vadd.f32 %v428, %v502
        %504 = vmatmul.f32.gmra.mxu0 %v448
        %v505 = vpop.f32.mrf.mxu0
        %v506 = vadd.f32 %v433, %v505
        %507 = vmatmul.f32.gmra.mxu0 %v451
        %v508 = vpop.f32.mrf.mxu0
        %v509 = vadd.f32 %v438, %v508
        %510 = vdwg.mxu0
        %v511 = vtanh.pop %v471
        %v512 = vtanh.pop %v500
        %v513 = vtanh.pop %v474
        %v514 = vtanh.pop %v503
        %v515 = vtanh.pop %v477
        %v516 = vtanh.pop %v506
        %v517 = vtanh.pop %v480
        %v518 = vtanh.pop %v509
        %v519 = vld [vmem:[%s5] sm:$0xff]
        %v520 = vld [vmem:[%s5 + $0x8] sm:$0xff]
        %v521 = vld [vmem:[%s5 + $0x10] sm:$0xff]
        %v522 = vld [vmem:[%s5 + $0x18] sm:$0xff]
        %v523 = vld [vmem:[%s5 + $0x20] sm:$0xff]
        %v524 = vld [vmem:[%s5 + $0x28] sm:$0xff]
        %v525 = vld [vmem:[%s5 + $0x30] sm:$0xff]
        %v526 = vld [vmem:[%s5 + $0x38] sm:$0xff]
        %v527 = vld [vmem:[%s6] sm:$0xff]
        %v528 = vld [vmem:[%s6 + $0x8] sm:$0xff]
        %v529 = vld [vmem:[%s6 + $0x10] sm:$0xff]
        %v530 = vld [vmem:[%s6 + $0x18] sm:$0xff]
        %v531 = vld [vmem:[%s6 + $0x20] sm:$0xff]
        %v532 = vld [vmem:[%s6 + $0x28] sm:$0xff]
        %v533 = vld [vmem:[%s6 + $0x30] sm:$0xff]
        %v534 = vld [vmem:[%s6 + $0x38] sm:$0xff]
        %536 = vset.pattern.permute.xlu0 0
        %537 = vperm.xlu0 %536, %v527
        %v538 = vpop.permute.xlu0 %537
        %541 = vset.pattern.permute.xlu0 0
        %542 = vperm.xlu0 %541, %v528
        %v543 = vpop.permute.xlu0 %542
        %546 = vset.pattern.permute.xlu0 0
        %547 = vperm.xlu0 %546, %v529
        %v548 = vpop.permute.xlu0 %547
        %551 = vset.pattern.permute.xlu0 0
        %552 = vperm.xlu0 %551, %v530
        %v553 = vpop.permute.xlu0 %552
        %556 = vset.pattern.permute.xlu0 0
        %557 = vperm.xlu0 %556, %v531
        %v558 = vpop.permute.xlu0 %557
        %561 = vset.pattern.permute.xlu0 0
        %562 = vperm.xlu0 %561, %v532
        %v563 = vpop.permute.xlu0 %562
        %566 = vset.pattern.permute.xlu0 0
        %567 = vperm.xlu0 %566, %v533
        %v568 = vpop.permute.xlu0 %567
        %571 = vset.pattern.permute.xlu0 0
        %572 = vperm.xlu0 %571, %v534
        %v573 = vpop.permute.xlu0 %572
        %v576 = vsel %vm440, %v519, 0
        %v579 = vsel %vm440, %v520, 0
        %v582 = vsel %vm440, %v521, 0
        %v585 = vsel %vm440, %v522, 0
        %v588 = vsel %vm440, %v523, 0
        %v591 = vsel %vm440, %v524, 0
        %v594 = vsel %vm440, %v525, 0
        %v597 = vsel %vm440, %v526, 0
        %599 = vmatpush.msra.mxu0 0.0
        %600 = vmatpush.msra.mxu0 0.0
        %601 = vmatpush.msra.mxu0 0.0
        %602 = vmatpush.msra.mxu0 0.0
        %603 = vmatpush.msra.mxu0 0.0
        %604 = vmatpush.msra.mxu0 0.0
        %605 = vmatpush.msra.mxu0 0.0
        %606 = vmatpush.msra.mxu0 0.0
        %607 = vmatpush.msra.mxu0 0.0
        %608 = vmatpush.msra.mxu0 0.0
        %609 = vmatpush.msra.mxu0 0.0
        %610 = vmatpush.msra.mxu0 0.0
        %611 = vmatpush.msra.mxu0 %v517
        %612 = vmatpush.msra.mxu0 %v515
        %613 = vmatpush.msra.mxu0 %v513
        %614 = vmatpush.msra.mxu0 %v511
        %615 = vmatmul.f32.gmra.mxu0 %v576
        %v616 = vpop.f32.mrf.mxu0
        %v617 = vadd.f32 %v538, %v616
        %618 = vmatmul.f32.gmra.mxu0 %v579
        %v619 = vpop.f32.mrf.mxu0
        %v620 = vadd.f32 %v543, %v619
        %621 = vmatmul.f32.gmra.mxu0 %v582
        %v622 = vpop.f32.mrf.mxu0
        %v623 = vadd.f32 %v548, %v622
        %624 = vmatmul.f32.gmra.mxu0 %v585
        %v625 = vpop.f32.mrf.mxu0
        %v626 = vadd.f32 %v553, %v625
        %627 = vmatmul.f32.gmra.mxu0 %v588
        %v628 = vpop.f32.mrf.mxu0
        %v629 = vadd.f32 %v558, %v628
        %630 = vmatmul.f32.gmra.mxu0 %v591
        %v631 = vpop.f32.mrf.mxu0
        %v632 = vadd.f32 %v563, %v631
        %633 = vmatmul.f32.gmra.mxu0 %v594
        %v634 = vpop.f32.mrf.mxu0
        %v635 = vadd.f32 %v568, %v634
        %636 = vmatmul.f32.gmra.mxu0 %v597
        %v637 = vpop.f32.mrf.mxu0
        %v638 = vadd.f32 %v573, %v637
        %639 = vdwg.mxu0
        %640 = vmatpush.msra.mxu0 0.0
        %641 = vmatpush.msra.mxu0 0.0
        %642 = vmatpush.msra.mxu0 0.0
        %643 = vmatpush.msra.mxu0 0.0
        %644 = vmatpush.msra.mxu0 0.0
        %645 = vmatpush.msra.mxu0 0.0
        %646 = vmatpush.msra.mxu0 0.0
        %647 = vmatpush.msra.mxu0 0.0
        %648 = vmatpush.msra.mxu0 0.0
        %649 = vmatpush.msra.mxu0 0.0
        %650 = vmatpush.msra.mxu0 0.0
        %651 = vmatpush.msra.mxu0 0.0
        %652 = vmatpush.msra.mxu0 %v518
        %653 = vmatpush.msra.mxu0 %v516
        %654 = vmatpush.msra.mxu0 %v514
        %655 = vmatpush.msra.mxu0 %v512
        %656 = vmatmul.f32.gmra.mxu0 %v576
        %v657 = vpop.f32.mrf.mxu0
        %v658 = vadd.f32 %v538, %v657
        %659 = vmatmul.f32.gmra.mxu0 %v579
        %v660 = vpop.f32.mrf.mxu0
        %v661 = vadd.f32 %v543, %v660
        %662 = vmatmul.f32.gmra.mxu0 %v582
        %v663 = vpop.f32.mrf.mxu0
        %v664 = vadd.f32 %v548, %v663
        %665 = vmatmul.f32.gmra.mxu0 %v585
        %v666 = vpop.f32.mrf.mxu0
        %v667 = vadd.f32 %v553, %v666
        %668 = vmatmul.f32.gmra.mxu0 %v588
        %v669 = vpop.f32.mrf.mxu0
        %v670 = vadd.f32 %v558, %v669
        %671 = vmatmul.f32.gmra.mxu0 %v591
        %v672 = vpop.f32.mrf.mxu0
        %v673 = vadd.f32 %v563, %v672
        %674 = vmatmul.f32.gmra.mxu0 %v594
        %v675 = vpop.f32.mrf.mxu0
        %v676 = vadd.f32 %v568, %v675
        %677 = vmatmul.f32.gmra.mxu0 %v597
        %v678 = vpop.f32.mrf.mxu0
        %v679 = vadd.f32 %v573, %v678
        %680 = vdwg.mxu0
        %681 = vst [vmem:[%s298] sm:$0xff] %v617
        %682 = vst [vmem:[%s298 + $0x8] sm:$0xff] %v658
        %683 = vst [vmem:[%s298 + $0x10] sm:$0xff] %v620
        %684 = vst [vmem:[%s298 + $0x18] sm:$0xff] %v661
        %685 = vst [vmem:[%s298 + $0x20] sm:$0xff] %v623
        %686 = vst [vmem:[%s298 + $0x28] sm:$0xff] %v664
        %687 = vst [vmem:[%s298 + $0x30] sm:$0xff] %v626
        %688 = vst [vmem:[%s298 + $0x38] sm:$0xff] %v667
        %689 = vst [vmem:[%s298 + $0x40] sm:$0xff] %v629
        %690 = vst [vmem:[%s298 + $0x48] sm:$0xff] %v670
        %691 = vst [vmem:[%s298 + $0x50] sm:$0xff] %v632
        %692 = vst [vmem:[%s298 + $0x58] sm:$0xff] %v673
        %693 = vst [vmem:[%s298 + $0x60] sm:$0xff] %v635
        %694 = vst [vmem:[%s298 + $0x68] sm:$0xff] %v676
        %695 = vst [vmem:[%s298 + $0x70] sm:$0xff] %v638
        %696 = vst [vmem:[%s298 + $0x78] sm:$0xff] %v679
        %s697 = sand.u32 %s178, 1
        %s698 = sand.u32 %s178, 1
        %s699 = smul.addr %s698, 128
        %s700 = scalar_lea.vmem [#allocation3], %s699
        // Predicated region
        $region72: #{branch_forward.1} parent=66 // pred_check
          %p701 = pneg %p188
        $region73: #{branch_forward.1} parent=66 // pred_check_branch
          %703 = sbr.rel (%p701) target = $region75
        $region74: #{branch_forward.1} parent=66 // pred_region
          %s704 = smul.u32 2, %s18
          %s705 = smul.addr %s704, 8
          %s706 = scalar_lea.vmem %s7, %s705
          // Predicated region
          $region76: #{branch_forward.1} parent=74 // pred_check
            _
          $region77: #{branch_forward.1} parent=74 // pred_check_branch
            %708 = sbr.rel (0) target = $region79
          $region78: #{branch_forward.1} parent=74 // pred_region
            // Predicated region
            $region80: #{branch_forward.1} parent=78 // pred_check
              _
            $region81: #{branch_forward.1} parent=78 // pred_check_branch
              %710 = sbr.rel (0) target = $region83
            $region82: #{branch_forward.1} parent=78 // pred_region
              loop: start=0, step=1, limit=1
              $region84: #{branch_forward.1} parent=82 // loop_pre_header
                _
              $region85: #{branch_forward.1} parent=82 // loop_header
                %s712 = sphi 0, %s716
                %p713 = scmp.ge.s32.totalorder %s712, 1
                %s717 = sphi %s700, %s700
                %s718 = sphi %s706, %s706
              $region86: #{branch_forward.1} parent=82 // loop_header_branch
                %715 = sbr.rel (%p713) target = $region90
              $region87: #{branch_forward.1} parent=82 // loop_body
                %v719 = vld [vmem:[%s717] sm:$0xff]
                %720 = vst [vmem:[%s718] sm:$0xff] %v719
                %v721 = vld [vmem:[%s717 + $0x8] sm:$0xff]
                %722 = vst [vmem:[%s718 + $0x8] sm:$0xff] %v721
                %v723 = vld [vmem:[%s717 + $0x10] sm:$0xff]
                %724 = vst [vmem:[%s718 + $0x20] sm:$0xff] %v723
                %v725 = vld [vmem:[%s717 + $0x18] sm:$0xff]
                %726 = vst [vmem:[%s718 + $0x28] sm:$0xff] %v725
                %v727 = vld [vmem:[%s717 + $0x20] sm:$0xff]
                %728 = vst [vmem:[%s718 + $0x40] sm:$0xff] %v727
                %v729 = vld [vmem:[%s717 + $0x28] sm:$0xff]
                %730 = vst [vmem:[%s718 + $0x48] sm:$0xff] %v729
                %v731 = vld [vmem:[%s717 + $0x30] sm:$0xff]
                %732 = vst [vmem:[%s718 + $0x60] sm:$0xff] %v731
                %v733 = vld [vmem:[%s717 + $0x38] sm:$0xff]
                %734 = vst [vmem:[%s718 + $0x68] sm:$0xff] %v733
                %v735 = vld [vmem:[%s717 + $0x40] sm:$0xff]
                %736 = vst [vmem:[%s718 + $0x80] sm:$0xff] %v735
                %v737 = vld [vmem:[%s717 + $0x48] sm:$0xff]
                %738 = vst [vmem:[%s718 + $0x88] sm:$0xff] %v737
                %v739 = vld [vmem:[%s717 + $0x50] sm:$0xff]
                %740 = vst [vmem:[%s718 + $0xa0] sm:$0xff] %v739
                %v741 = vld [vmem:[%s717 + $0x58] sm:$0xff]
                %742 = vst [vmem:[%s718 + $0xa8] sm:$0xff] %v741
                %v743 = vld [vmem:[%s717 + $0x60] sm:$0xff]
                %744 = vst [vmem:[%s718 + $0xc0] sm:$0xff] %v743
                %v745 = vld [vmem:[%s717 + $0x68] sm:$0xff]
                %746 = vst [vmem:[%s718 + $0xc8] sm:$0xff] %v745
                %v747 = vld [vmem:[%s717 + $0x70] sm:$0xff]
                %748 = vst [vmem:[%s718 + $0xe0] sm:$0xff] %v747
                %v749 = vld [vmem:[%s717 + $0x78] sm:$0xff]
                %750 = vst [vmem:[%s718 + $0xe8] sm:$0xff] %v749
              $region88: #{branch_forward.1} parent=82 // loop_footer
                %s716 = sadd.s32 1, %s712
              $region89: #{branch_forward.1} parent=82 // loop_footer_branch
                %711 = sbr.rel target = $region85
              $region90: #{branch_forward.1} parent=82 // loop_exit
                _
            $region83: #{branch_forward.1} parent=78 // pred_fallthru
              _
            // Predicated region
            $region91: #{branch_forward.1} parent=78 // pred_check
              _
            $region92: #{branch_forward.1} parent=78 // pred_check_branch
              %752 = sbr.rel target = $region94
            $region93: #{branch_forward.1} parent=78 // pred_region
              _
            $region94: #{branch_forward.1} parent=78 // pred_fallthru
              _
          $region79: #{branch_forward.1} parent=74 // pred_fallthru
            _
          %753 = vnop
        $region75: #{branch_forward.1} parent=66 // pred_fallthru
          _
      $region67: #{branch_forward.1} parent=5 // pred_fallthru
        _
      %p754 = scmp.le.s32.totalorder 2, %s13
      // Predicated region
      $region95: #{branch_forward.1} parent=5 // pred_check
        %p755 = pneg %p754
      $region96: #{branch_forward.1} parent=5 // pred_check_branch
        %757 = sbr.rel (%p755) target = $region98
      $region97: #{branch_forward.1} parent=5 // pred_region
        %s758 = ssub.s32 %s13, 2
        // Predicated region
        $region99: #{branch_forward.1} parent=97 // pred_check
          %p759 = pneg %p194
        $region100: #{branch_forward.1} parent=97 // pred_check_branch
          %761 = sbr.rel (%p759) target = $region102
        $region101: #{branch_forward.1} parent=97 // pred_region
          %s762 = sand.u32 %s179, 1
          %s763 = sand.u32 %s179, 1
          %s764 = smul.addr %s763, 128
          %s765 = scalar_lea.vmem [#allocation3], %s764
        $region102: #{branch_forward.1} parent=97 // pred_fallthru
          _
      $region98: #{branch_forward.1} parent=5 // pred_fallthru
        _
    $region6: #{branch_forward.1} parent=1 // loop_footer
      %s17 = sadd.s32 1, %s13
    $region7: #{branch_forward.1} parent=1 // loop_footer_branch
      %12 = sbr.rel target = $region3
    $region8: #{branch_forward.1} parent=1 // loop_exit
      _

</llo_original>
